<compile_context>
chip_gen: v7x
topology: tpu7x:2x2x1
jax: 0.10.0
libtpu: 0.0.40
codegen_flags: <defaults>
</compile_context>

<pallas_src>
import math
import functools

import jax
import jax.numpy as jnp
from jax import lax
from jax.experimental import pallas as pl
from jax.experimental.pallas import tpu as pltpu

_MIB = 1024 * 1024
_SDPA_KV_BUDGET = 16 * _MIB      # double-buffered K+V panels
_SDPA_Q_BUDGET = 8 * _MIB        # double-buffered Q panel
_ADDNORM_BUDGET = 24 * _MIB
_FFN_FUSE_BUDGET = 12 * _MIB


# ----------------------------------------------------------------------------
# small helpers
# ----------------------------------------------------------------------------
def _round_up(x, m):
    return ((x + m - 1) // m) * m


def _pad2d(a, rows, cols):
    r, c = a.shape
    if r == rows and c == cols:
        return a
    return jnp.pad(a, ((0, rows - r), (0, cols - c)))


def _pad_seq(x, s_pad):
    if x.shape[1] == s_pad:
        return x
    return jnp.pad(x, ((0, 0), (0, s_pad - x.shape[1]), (0, 0)))


def _vmem_limit(nbytes):
    # Scoped-VMEM limit derived from the actual tile footprint, capped so the
    # same kernels stay well inside v7x's 64 MiB physical VMEM (headroom for
    # the other kernels running in the same step on v5e/v6e too).
    return int(min(max(int(nbytes) * 5 // 4 + _MIB, 16 * _MIB), 48 * _MIB))


def _choose_tn(N):
    """Lane-dense output tile: minimize padding for awkward N."""
    n128 = _round_up(N, 128)
    if n128 <= 1024:
        return n128, n128
    best = None
    for tn in (1024, 512, 384, 256, 128):
        n_pad = _round_up(N, tn)
        waste = n_pad - N
        if waste * 16 <= N:          # <= 6.25% padding waste -> take largest TN
            return tn, n_pad
        if best is None or waste < best[2]:
            best = (tn, n_pad, waste)
    return best[0], best[1]


# ----------------------------------------------------------------------------
# Pallas kernels
# ----------------------------------------------------------------------------
def _make_linear_kernel(has_bias, activation):
    """K-tiled matmul with f32 VMEM accumulator; bias/activation on finalize."""

    def kernel(*refs):
        if has_bias:
            x_ref, w_ref, b_ref, o_ref, acc_ref = refs
        else:
            x_ref, w_ref, o_ref, acc_ref = refs
            b_ref = None

        @pl.when(pl.program_id(2) == 0)
        def _init():
            acc_ref[...] = jnp.zeros_like(acc_ref)

        acc_ref[...] += jnp.dot(x_ref[...], w_ref[...],
                                preferred_element_type=jnp.float32)

        @pl.when(pl.program_id(2) == pl.num_programs(2) - 1)
        def _finalize():
            r = acc_ref[...]
            if has_bias:
                r = r + b_ref[...]
            if activation == "relu":
                r = jnp.maximum(r, 0.0)
            o_ref[...] = r.astype(o_ref.dtype)

    return kernel


def _addnorm_kernel(x_ref, y_ref, g_ref, b_ref, o_ref, *, eps):
    # LayerNorm(dropout(Y) + X), dropout p = 0 -> identity.
    # bf16 in / bf16 out, f32 math.
    s = x_ref[...].astype(jnp.float32) + y_ref[...].astype(jnp.float32)
    mean = jnp.mean(s, axis=-1, keepdims=True)
    var = jnp.mean(jnp.square(s - mean), axis=-1, keepdims=True)
    o_ref[...] = ((s - mean) * lax.rsqrt(var + eps) * g_ref[...]
                  + b_ref[...]).astype(o_ref.dtype)


def _ffn_fused_kernel(x_ref, w1_ref, b1_ref, w2_ref, b2_ref, o_ref):
    # dense2(relu(dense1(x))) with both weight matrices VMEM-resident;
    # the ReLU intermediate never touches HBM.
    h = jnp.dot(x_ref[...], w1_ref[...], preferred_element_type=jnp.float32)
    h = jnp.maximum(h + b1_ref[...], 0.0).astype(jnp.bfloat16)
    o = jnp.dot(h, w2_ref[...], preferred_element_type=jnp.float32) + b2_ref[...]
    o_ref[...] = o.astype(o_ref.dtype)


def _make_flash_kernel(num_head, d_head, tq, tk, sk_actual, sk_pad,
                       causal, need_weights):
    """Flash-style SDPA over (batch, q-tile, k-tile) grid; heads as static lane
    slices of flat [*, H] tiles; online softmax in f32 scratch.

    Matches the PyTorch DotProductAttention + masked_softmax semantics:
    in training mode decode_mask = arange(1, Sq+1) -> query row i attends to
    key columns 0..i of the FULL key length (masked value -1e6), which is
    exactly `col_global <= row_global` below.  1/sqrt(d_head) is folded into
    Wq at init, so no scaling here.
    """
    mask_cols = (sk_actual != sk_pad)

    def kernel(q_ref, k_ref, v_ref, *refs):
        if need_weights:
            o_ref, w_ref, m_ref, l_ref, acc_ref = refs
        else:
            o_ref, m_ref, l_ref, acc_ref = refs
            w_ref = None

        qi = pl.program_id(1)
        ki = pl.program_id(2)

        @pl.when(ki == 0)
        def _init():
            m_ref[...] = jnp.full_like(m_ref, -1e30)
            l_ref[...] = jnp.zeros_like(l_ref)
            acc_ref[...] = jnp.zeros_like(acc_ref)

        def compute():
            q = q_ref[0]                    # (tq, H)  bf16
            k = k_ref[0]                    # (tk, H)  bf16
            v = v_ref[0]                    # (tk, H)  bf16
            valid = None
            if causal or mask_cols:
                col_g = ki * tk + lax.broadcasted_iota(jnp.int32, (tq, tk), 1)
            if mask_cols:
                valid = col_g < sk_actual
            if causal:
                row_g = qi * tq + lax.broadcasted_iota(jnp.int32, (tq, tk), 0)
                cm = col_g <= row_g
                valid = cm if valid is None else jnp.logical_and(valid, cm)

            for h in range(num_head):
                hs = slice(h * d_head, (h + 1) * d_head)
                # q_h.k_h^T expressed as a contraction (no materialized transpose)
                s = lax.dot_general(q[:, hs], k[:, hs],
                                    (((1,), (1,)), ((), ())),
                                    preferred_element_type=jnp.float32)
                if valid is not None:
                    s = jnp.where(valid, s, -1000000.0)
                m_prev = m_ref[h]                                   # (tq, 1)
                m_new = jnp.maximum(m_prev, jnp.max(s, axis=-1, keepdims=True))
                alpha = jnp.exp(m_prev - m_new)
                p = jnp.exp(s - m_new)
                l_ref[h] = alpha * l_ref[h] + jnp.sum(p, axis=-1, keepdims=True)
                acc_ref[h] = alpha * acc_ref[h] + jnp.dot(
                    p.astype(v.dtype), v[:, hs],
                    preferred_element_type=jnp.float32)
                m_ref[h] = m_new
                if need_weights:
                    # weights path runs with a single key tile, so l is final here.
                    inv = pl.reciprocal(l_ref[h], approx=True)
                    w_ref[0, h] = (p * inv).astype(w_ref.dtype)

        if causal:
            # skip key tiles that are entirely in the masked (future) region
            @pl.when(ki * tk <= qi * tq + (tq - 1))
            def _masked_compute():
                compute()
        else:
            compute()

        @pl.when(ki == pl.num_programs(2) - 1)
        def _finalize():
            parts = []
            for h in range(num_head):
                inv = pl.reciprocal(l_ref[h], approx=True)          # EUP divide
                parts.append(acc_ref[h] * inv)
            # single lane-dense (tq, H) store
            o_ref[0] = jnp.concatenate(parts, axis=-1).astype(o_ref.dtype)

    return kernel


# ----------------------------------------------------------------------------
# weight preparation (pad + cast ONCE at init)
# ----------------------------------------------------------------------------
def prep_linear(w, b=None):
    K, N = w.shape
    if K > 512:
        TK = 512
        K_pad = _round_up(K, TK)
    else:
        TK = K
        K_pad = K
    TN, N_pad = _choose_tn(N)
    return {
        "w": _pad2d(w, K_pad, N_pad).astype(jnp.bfloat16),
        "b": None if b is None else
             _pad2d(b.reshape(1, N).astype(jnp.float32), 1, N_pad),
        "K": K, "N": N, "TK": TK, "TN": TN,
    }


def prep_ffn(w1, b1, w2, b2):
    Hin, F = w1.shape
    _, Ho = w2.shape
    F_pad = _round_up(F, 128)
    Ho_pad = _round_up(Ho, 128)
    tm = 256
    weight_bytes = 2 * (Hin * F_pad + F_pad * Ho_pad) * 2          # double-buffered bf16
    act_bytes = 2 * tm * Hin * 2 + tm * F_pad * 4 + 2 * tm * Ho_pad * 2
    if weight_bytes + act_bytes <= _FFN_FUSE_BUDGET:
        return {
            "fused": True, "TM": tm, "H": Hin, "F": F, "Ho": Ho,
            "w1": _pad2d(w1, Hin, F_pad).astype(jnp.bfloat16),
            "b1": _pad2d(b1.reshape(1, F).astype(jnp.float32), 1, F_pad),
            "w2": _pad2d(w2, F_pad, Ho_pad).astype(jnp.bfloat16),
            "b2": _pad2d(b2.reshape(1, Ho).astype(jnp.float32), 1, Ho_pad),
        }
    return {"fused": False,
            "lin1": prep_linear(w1, b1),
            "lin2": prep_linear(w2, b2)}


# ----------------------------------------------------------------------------
# Pallas wrappers
# ----------------------------------------------------------------------------
def pallas_linear(x2d, lin, *, activation=None, out_dtype=jnp.bfloat16):
    """y = act(x @ w + b) with pre-padded bf16 weights, f32 accumulation."""
    M, K = x2d.shape
    assert K == lin["K"]
    w_p, b_p = lin["w"], lin["b"]
    K_pad, N_pad = w_p.shape
    TK, TN, N = lin["TK"], lin["TN"], lin["N"]

    TM = 512 if M >= 512 else _round_up(M, 16)       # bf16 sublane packing
    M_pad = _round_up(M, TM)
    x_p = _pad2d(x2d, M_pad, K_pad).astype(jnp.bfloat16)

    has_bias = b_p is not None
    args = [x_p, w_p]
    in_specs = [pl.BlockSpec((TM, TK), lambda i, j, k: (i, k)),
                pl.BlockSpec((TK, TN), lambda i, j, k: (k, j))]
    if has_bias:
        args.append(b_p)
        in_specs.append(pl.BlockSpec((1, TN), lambda i, j, k: (0, j)))

    out_bytes = jnp.dtype(out_dtype).itemsize
    footprint = (2 * (TM * TK * 2 + TK * TN * 2 + TM * TN * out_bytes)
                 + TM * TN * 4 + 2 * TN * 4)
    # TODO(synk): for v7x single-row-tile decode matmuls, split N across the
    #             parallel grid axis so both TensorCores stay busy.
    out = pl.pallas_call(
        _make_linear_kernel(has_bias, activation),
        grid=(M_pad // TM, N_pad // TN, K_pad // TK),
        in_specs=in_specs,
        out_specs=pl.BlockSpec((TM, TN), lambda i, j, k: (i, j)),
        out_shape=jax.ShapeDtypeStruct((M_pad, N_pad), out_dtype),
        scratch_shapes=[pltpu.VMEM((TM, TN), jnp.float32)],
        compiler_params=pltpu.CompilerParams(
            dimension_semantics=("parallel", "parallel", "arbitrary"),
            vmem_limit_bytes=_vmem_limit(footprint)),
    )(*args)
    return out[:M, :N]


def pallas_ffn(x2d, ffn):
    if not ffn["fused"]:
        # K/F-tiled fallback (large H/F): ReLU fused into the first finalize.
        h = pallas_linear(x2d, ffn["lin1"], activation="relu",
                          out_dtype=jnp.bfloat16)
        return pallas_linear(h, ffn["lin2"], out_dtype=jnp.bfloat16)

    M, Hin = x2d.shape
    assert Hin == ffn["H"]
    TM = min(ffn["TM"], _round_up(M, 16))
    M_pad = _round_up(M, TM)
    x_p = _pad2d(x2d, M_pad, Hin).astype(jnp.bfloat16)
    w1, b1, w2, b2 = ffn["w1"], ffn["b1"], ffn["w2"], ffn["b2"]
    F_pad, Ho_pad = w1.shape[1], w2.shape[1]
    footprint = (2 * TM * Hin * 2 + 2 * (Hin * F_pad + F_pad * Ho_pad) * 2
                 + TM * F_pad * 4 + 2 * TM * Ho_pad * 2)
    out = pl.pallas_call(
        _ffn_fused_kernel,
        grid=(M_pad // TM,),
        in_specs=[pl.BlockSpec((TM, Hin), lambda i: (i, 0)),
                  pl.BlockSpec(w1.shape, lambda i: (0, 0)),
                  pl.BlockSpec(b1.shape, lambda i: (0, 0)),
                  pl.BlockSpec(w2.shape, lambda i: (0, 0)),
                  pl.BlockSpec(b2.shape, lambda i: (0, 0))],
        out_specs=pl.BlockSpec((TM, Ho_pad), lambda i: (i, 0)),
        out_shape=jax.ShapeDtypeStruct((M_pad, Ho_pad), jnp.bfloat16),
        compiler_params=pltpu.CompilerParams(
            dimension_semantics=("parallel",),
            vmem_limit_bytes=_vmem_limit(footprint)),
    )(x_p, w1, b1, w2, b2)
    return out[:M, :ffn["Ho"]]


def pallas_add_layernorm(x, y, gamma, beta, eps=1e-5):
    # LayerNorm(Y + X) over flattened [B*S, H] rows; bf16 traffic, f32 math.
    B, S, Hd = x.shape
    M = B * S
    x2 = x.reshape(M, Hd).astype(jnp.bfloat16)
    y2 = y.reshape(M, Hd).astype(jnp.bfloat16)

    TM = 512 if M >= 512 else _round_up(M, 16)
    while TM > 16 and 20 * TM * Hd > _ADDNORM_BUDGET:   # v7x-safe row tile
        TM = max(16, _round_up(TM // 2, 16))
    M_pad = _round_up(M, TM)
    x2 = _pad2d(x2, M_pad, Hd)
    y2 = _pad2d(y2, M_pad, Hd)
    g = gamma.reshape(1, Hd).astype(jnp.float32)
    b = beta.reshape(1, Hd).astype(jnp.float32)

    footprint = 12 * TM * Hd + 8 * TM * Hd + 4 * Hd * 4
    out = pl.pallas_call(
        functools.partial(_addnorm_kernel, eps=eps),
        grid=(M_pad // TM,),
        in_specs=[pl.BlockSpec((TM, Hd), lambda i: (i, 0)),
                  pl.BlockSpec((TM, Hd), lambda i: (i, 0)),
                  pl.BlockSpec((1, Hd), lambda i: (0, 0)),
                  pl.BlockSpec((1, Hd), lambda i: (0, 0))],
        out_specs=pl.BlockSpec((TM, Hd), lambda i: (i, 0)),
        out_shape=jax.ShapeDtypeStruct((M_pad, Hd), jnp.bfloat16),
        compiler_params=pltpu.CompilerParams(
            dimension_semantics=("parallel",),
            vmem_limit_bytes=_vmem_limit(footprint)),
    )(x2, y2, g, b)
    return out[:M].reshape(B, S, Hd)


def pallas_sdpa(q, k, v, num_head, causal, need_weights=False):
    """q/k/v: [B, S, H] bf16 (flat head layout). Returns [B, Sq, H] context
    (+ optional [B, nh, Sq, Sk] probabilities)."""
    B, Sq, H = q.shape
    Sk = k.shape[1]
    D = H // num_head

    # budget-driven tiles so double-buffered K/V + Q panels stay v7x-safe
    tq = min(256, _round_up(Sq, 16))
    tk = min(512, _round_up(Sk, 16))
    while tk > 128 and 8 * tk * H > _SDPA_KV_BUDGET:
        tk //= 2
    while tq > 64 and 4 * tq * H > _SDPA_Q_BUDGET:
        tq //= 2
    if need_weights:
        # exact normalized probabilities need the whole key axis in one tile
        tk = _round_up(Sk, 16)
    Sq_pad = _round_up(Sq, tq)
    Sk_pad = _round_up(Sk, tk)

    q_p = _pad_seq(q, Sq_pad).astype(jnp.bfloat16)
    k_p = _pad_seq(k, Sk_pad).astype(jnp.bfloat16)
    v_p = _pad_seq(v, Sk_pad).astype(jnp.bfloat16)

    kern = _make_flash_kernel(num_head, D, tq, tk, Sk, Sk_pad,
                              causal, need_weights)
    grid = (B, Sq_pad // tq, Sk_pad // tk)
    in_specs = [pl.BlockSpec((1, tq, H), lambda b, qi, ki: (b, qi, 0)),
                pl.BlockSpec((1, tk, H), lambda b, qi, ki: (b, ki, 0)),
                pl.BlockSpec((1, tk, H), lambda b, qi, ki: (b, ki, 0))]
    out_specs = pl.BlockSpec((1, tq, H), lambda b, qi, ki: (b, qi, 0))
    out_shape = jax.ShapeDtypeStruct((B, Sq_pad, H), jnp.bfloat16)
    if need_weights:
        out_specs = (out_specs,
                     pl.BlockSpec((1, num_head, tq, Sk_pad),
                                  lambda b, qi, ki: (b, 0, qi, 0)))
        out_shape = (out_shape,
                     jax.ShapeDtypeStruct((B, num_head, Sq_pad, Sk_pad),
                                          jnp.float32))
    scratch = [pltpu.VMEM((num_head, tq, 1), jnp.float32),
               pltpu.VMEM((num_head, tq, 1), jnp.float32),
               pltpu.VMEM((num_head, tq, D), jnp.float32)]
    footprint = (2 * tq * H * 2 + 2 * 2 * tk * H * 2 + 2 * tq * H * 2
                 + num_head * tq * (D + 2) * 4)
    if need_weights:
        footprint += 2 * num_head * tq * Sk_pad * 4
    # TODO(synk): for B==1, single-q-tile decode on v7x, split heads across a
    #             parallel grid axis so the second TensorCore is not idle.
    res = pl.pallas_call(
        kern, grid=grid,
        in_specs=in_specs, out_specs=out_specs, out_shape=out_shape,
        scratch_shapes=scratch,
        compiler_params=pltpu.CompilerParams(
            dimension_semantics=("parallel", "parallel", "arbitrary"),
            vmem_limit_bytes=_vmem_limit(footprint)),
    )(q_p, k_p, v_p)
    if need_weights:
        ctx, w = res
        return ctx[:, :Sq, :], w[:, :, :Sq, :Sk]
    return res[:, :Sq, :], None


# ----------------------------------------------------------------------------
# Multi-head attention (flat head layout end-to-end; no XLA head transposes)
# ----------------------------------------------------------------------------
def multi_head_attention(xq, xkv, p, num_head, causal, need_weights=False):
    B, Sq, _ = xq.shape
    Sk = xkv.shape[1]
    H = p["Wq"]["N"]

    q = pallas_linear(xq.reshape(-1, xq.shape[-1]), p["Wq"],
                      out_dtype=jnp.bfloat16).reshape(B, Sq, H)
    kv = pallas_linear(xkv.reshape(-1, xkv.shape[-1]), p["Wkv"],
                       out_dtype=jnp.bfloat16).reshape(B, Sk, 2 * H)
    k, v = kv[..., :H], kv[..., H:]

    ctx, attn_w = pallas_sdpa(q, k, v, num_head, causal, need_weights)
    o = pallas_linear(ctx.reshape(-1, H), p["Wo"], out_dtype=jnp.bfloat16)
    return o.reshape(B, Sq, p["Wo"]["N"]), attn_w


def positional_encoding_table(max_len, H):
    pos = jnp.arange(max_len, dtype=jnp.float32)[:, None]
    div = jnp.power(10000.0, jnp.arange(0, H, 2, dtype=jnp.float32) / H)
    ang = pos / div
    P = jnp.zeros((max_len, H), jnp.float32)
    P = P.at[:, 0::2].set(jnp.sin(ang))
    P = P.at[:, 1::2].set(jnp.cos(ang))
    return P


# ----------------------------------------------------------------------------
# Parameter init (deterministic, synthetic); weights pre-padded/pre-cast once.
# ----------------------------------------------------------------------------
def init_params(key, vocab_size, H, ffn_hidden, num_head, num_layer, max_len=1000):
    D = H // num_head
    inv_sqrt_d = 1.0 / math.sqrt(D)

    def nrm(k, shape, scale=0.02):
        return scale * jax.random.normal(k, shape, jnp.float32)

    def attn_params(k):
        kq, kk, kv, ko = jax.random.split(k, 4)
        wq = nrm(kq, (H, H)) * inv_sqrt_d                  # fold 1/sqrt(d_head)
        wkv = jnp.concatenate([nrm(kk, (H, H)), nrm(kv, (H, H))], axis=1)
        wo = nrm(ko, (H, H))
        return {"Wq": prep_linear(wq), "Wkv": prep_linear(wkv),
                "Wo": prep_linear(wo)}

    keys = jax.random.split(key, 3 + num_layer)
    params = {
        "embedding": nrm(keys[0], (vocab_size, H)),
        "pos_P": positional_encoding_table(max_len, H),
        "dense": prep_linear(nrm(keys[1], (H, vocab_size)),
                             nrm(keys[2], (vocab_size,))),
        "layers": [],
    }
    for li in range(num_layer):
        lk = jax.random.split(keys[3 + li], 6)
        lp = {
            "self_attn": attn_params(lk[0]),
            "cross_attn": attn_params(lk[1]),
            "ln1_g": jnp.ones((H,), jnp.float32), "ln1_b": jnp.zeros((H,), jnp.float32),
            "ln2_g": jnp.ones((H,), jnp.float32), "ln2_b": jnp.zeros((H,), jnp.float32),
            "ln3_g": jnp.ones((H,), jnp.float32), "ln3_b": jnp.zeros((H,), jnp.float32),
            "ffn": prep_ffn(nrm(lk[2], (H, ffn_hidden)), nrm(lk[3], (ffn_hidden,)),
                            nrm(lk[4], (ffn_hidden, H)), nrm(lk[5], (H,))),
        }
        params["layers"].append(lp)
    return params


# ----------------------------------------------------------------------------
# Decoder forward (mirrors Decoder.forward / DecoderUnit.forward, training=True)
# ----------------------------------------------------------------------------
def decoder_forward(tokens, state, params, num_head, need_weights=False):
    emb_w = params["embedding"]
    H = emb_w.shape[1]
    B, S = tokens.shape
    x = emb_w[tokens] * math.sqrt(H)                 # embedding * sqrt(d)
    x = x + params["pos_P"][:S][None, :, :]          # positional encoding
    x = x.astype(jnp.bfloat16)                       # bf16 residual stream
    # dropout p = 0 -> identity

    enc_out, enc_mask, kv_cache = state
    enc_bf16 = enc_out.astype(jnp.bfloat16)
    # TODO(synk): non-None encode_mask (valid_lens) is not supported in the
    #             cross-attention softmax (the reference passes None here).
    new_kv = list(kv_cache)
    attn_weights = [[None] * len(params["layers"]) for _ in range(2)]

    for i, lp in enumerate(params["layers"]):
        # TODO(synk): for decode, preallocate the KV cache and update in place
        #             via input_output_aliases instead of concatenate.
        kv = x if kv_cache[i] is None else jnp.concatenate(
            [kv_cache[i].astype(jnp.bfloat16), x], axis=1)
        new_kv[i] = kv
        # masked (causal) multi-head self-attention; training-mode decode_mask
        x2, w_self = multi_head_attention(x, kv, lp["self_attn"], num_head,
                                          causal=True, need_weights=need_weights)
        y = pallas_add_layernorm(x, x2, lp["ln1_g"], lp["ln1_b"])
        # encoder-decoder attention (encode_mask is None -> unmasked softmax)
        # TODO(synk): cache the enc-out K/V projections across decode steps.
        y2, w_cross = multi_head_attention(y, enc_bf16, lp["cross_attn"], num_head,
                                           causal=False, need_weights=need_weights)
        z = pallas_add_layernorm(y, y2, lp["ln2_g"], lp["ln2_b"])
        f = pallas_ffn(z.reshape(-1, H), lp["ffn"]).reshape(z.shape)
        x = pallas_add_layernorm(z, f, lp["ln3_g"], lp["ln3_b"])
        attn_weights[0][i] = w_self
        attn_weights[1][i] = w_cross

    logits = pallas_linear(x.reshape(-1, H), params["dense"],
                           out_dtype=jnp.float32)
    V = params["dense"]["N"]
    logits = logits.reshape(B, S, V)
    return logits, [enc_out, enc_mask, new_kv], attn_weights


# ----------------------------------------------------------------------------
if __name__ == "__main__":
    # small shapes consistent with the module
    vocab_size = 50
    batch, seq = 2, 8
    num_hiddens = 32        # == seq_size (required for residual add to type-check)
    ffn_hidden = 64
    num_head = 4
    num_layer = 2

    root = jax.random.PRNGKey(0)
    k_param, k_tok, k_enc = jax.random.split(root, 3)

    params = init_params(k_param, vocab_size, num_hiddens, ffn_hidden,
                         num_head, num_layer)
    tokens = jax.random.randint(k_tok, (batch, seq), 0, vocab_size, dtype=jnp.int32)
    encode_output = 0.1 * jax.random.normal(k_enc, (batch, seq, num_hiddens),
                                            jnp.float32)

    # Decoder.init_state
    state = [encode_output, None, [None] * num_layer]

    logits, new_state, attn_w = decoder_forward(tokens, state, params, num_head,
                                                need_weights=False)
    logits = jax.block_until_ready(logits)
    jax.block_until_ready(new_state[2][0])

    assert logits.shape == (batch, seq, vocab_size)
    assert bool(jnp.all(jnp.isfinite(logits)))
    print("KERNEL_OK")
</pallas_src>

<mosaic_0001>
module attributes {stable_mosaic.version = 11 : i64} {
  func.func @kernel(%arg0: i32, %arg1: i32, %arg2: i32, %arg3: memref<16x32xbf16, #tpu.memory_space<vmem>>, %arg4: memref<32x128xbf16, #tpu.memory_space<vmem>>, %arg5: memref<16x128xbf16, #tpu.memory_space<vmem>>, %arg6: memref<16x128xf32, #tpu.memory_space<vmem>>) attributes {dimension_semantics = [#tpu.dimension_semantics<parallel>, #tpu.dimension_semantics<parallel>, #tpu.dimension_semantics<arbitrary>], iteration_bounds = array<i64: 1, 1, 1>, scalar_prefetch = 0 : i64, scratch_operands = 1 : i64, tpu.core_type = #tpu.core_type<tc>, window_params = [{transform_indices = @transform_0, window_bounds = array<i64: 16, 32>}, {transform_indices = @transform_1, window_bounds = array<i64: 32, 128>}, {transform_indices = @transform_2, window_bounds = array<i64: 16, 128>}]} {
    %c0_i32 = arith.constant 0 : i32
    %0 = arith.cmpi eq, %arg2, %c0_i32 : i32
    %1 = arith.extui %0 : i1 to i32
    %c0_i32_0 = arith.constant 0 : i32
    %2 = arith.cmpi ne, %1, %c0_i32_0 : i32
    scf.if %2 {
      %cst_10 = arith.constant 0.000000e+00 : f32
      %12 = vector.broadcast %cst_10 : f32 to vector<16x128xf32>
      %c0_11 = arith.constant 0 : index
      %c0_12 = arith.constant 0 : index
      %13 = vector.load %arg6[%c0_11, %c0_12] : memref<16x128xf32, #tpu.memory_space<vmem>>, vector<16x128xf32>
      tpu.vector_store %arg6[%c0_11, %c0_12], %12 {strides = array<i32>} : memref<16x128xf32, #tpu.memory_space<vmem>>, vector<16x128xf32>,
    } else {
    }
    %c0 = arith.constant 0 : index
    %c0_1 = arith.constant 0 : index
    %3 = vector.load %arg6[%c0, %c0_1] : memref<16x128xf32, #tpu.memory_space<vmem>>, vector<16x128xf32>
    %c0_2 = arith.constant 0 : index
    %c0_3 = arith.constant 0 : index
    %4 = vector.load %arg3[%c0_2, %c0_3] : memref<16x32xbf16, #tpu.memory_space<vmem>>, vector<16x32xbf16>
    %c0_4 = arith.constant 0 : index
    %c0_5 = arith.constant 0 : index
    %5 = vector.load %arg4[%c0_4, %c0_5] : memref<32x128xbf16, #tpu.memory_space<vmem>>, vector<32x128xbf16>
    %cst = arith.constant dense<0.000000e+00> : vector<16x128xf32>
    %6 = tpu.matmul %4, %5, %cst {dimension_numbers = #tpu.dot_dimension_numbers<[1], [0], [0], [1], [0, 0, 1, 1], [], []>} : vector<16x32xbf16>, vector<32x128xbf16>, vector<16x128xf32> -> vector<16x128xf32>
    %7 = arith.addf %3, %6 : vector<16x128xf32>
    %c0_6 = arith.constant 0 : index
    %c0_7 = arith.constant 0 : index
    %8 = vector.load %arg6[%c0_6, %c0_7] : memref<16x128xf32, #tpu.memory_space<vmem>>, vector<16x128xf32>
    tpu.vector_store %arg6[%c0_6, %c0_7], %7 {strides = array<i32>} : memref<16x128xf32, #tpu.memory_space<vmem>>, vector<16x128xf32>,
    %c0_i32_8 = arith.constant 0 : i32
    %9 = arith.cmpi eq, %arg2, %c0_i32_8 : i32
    %10 = arith.extui %9 : i1 to i32
    %c0_i32_9 = arith.constant 0 : i32
    %11 = arith.cmpi ne, %10, %c0_i32_9 : i32
    scf.if %11 {
      %c0_10 = arith.constant 0 : index
      %c0_11 = arith.constant 0 : index
      %12 = vector.load %arg6[%c0_10, %c0_11] : memref<16x128xf32, #tpu.memory_space<vmem>>, vector<16x128xf32>
      %13 = arith.truncf %12 : vector<16x128xf32> to vector<16x128xbf16>
      %c0_12 = arith.constant 0 : index
      %c0_13 = arith.constant 0 : index
      %14 = vector.load %arg5[%c0_12, %c0_13] : memref<16x128xbf16, #tpu.memory_space<vmem>>, vector<16x128xbf16>
      tpu.vector_store %arg5[%c0_12, %c0_13], %13 {strides = array<i32>} : memref<16x128xbf16, #tpu.memory_space<vmem>>, vector<16x128xbf16>,
    } else {
    }
    return
  }
  func.func @transform_0(%arg0: i32, %arg1: i32, %arg2: i32) -> (i32, i32) {
    %c0_i32 = arith.constant 0 : i32
    return %arg0, %arg2 : i32, i32
  }
  func.func @transform_1(%arg0: i32, %arg1: i32, %arg2: i32) -> (i32, i32) {
    %c0_i32 = arith.constant 0 : i32
    return %arg2, %arg1 : i32, i32
  }
  func.func @transform_2(%arg0: i32, %arg1: i32, %arg2: i32) -> (i32, i32) {
    %c0_i32 = arith.constant 0 : i32
    return %arg0, %arg1 : i32, i32
  }
}

</mosaic_0001>

<llo_original>
// kernel: tpu_custom_call.1
$region0: #{tpu_custom_call.1}
  #allocation0 [shape = 'u32[]', space=smem, size = 0x4, offset = 0x4, fixed_abs, tag = 'smem constant byte address 0x4 - core index']
  #allocation1 [shape = 'u32[144,128]{1,0:T(1,128)}', space=vmem, size = 0x12000, scoped, tag = 'internal scratch']
  #allocation2 [shape = 'f32[16,128]{1,0:T(8,128)}', space=vmem, size = 0x2000, scoped, tag = 'scratch operand']
  %s0 = inlined_call_operand.hbm [shape: bf16[16,32], index: 0, kind: input, shape index: {}]
  %s1 = inlined_call_operand.hbm [shape: bf16[32,128], index: 1, kind: input, shape index: {}]
  %s2 = inlined_call_operand.hbm [shape: bf16[16,128], index: 2, kind: output, shape index: {}]
  %s3 = sld [smem:[#allocation0]]
  $region34: #{tpu_custom_call.1} parent=0
    _
  %s5 = ssub.s32 1, %s3
  %s6 = scalar_select 0, %s5, %s3
  $region1: #{tpu_custom_call.1} parent=0
    #allocation3 [shape = 'u8[4096]{0}', space=vmem, size = 0x1000, scoped, tag = 'input window, operand 0, single buffered']
    #allocation4 [shape = 's32[1]{0}', space=sflag, size = 0x4, scoped, tag = 'scoped memory for tpu_custom_call.1']
    #allocation5 [shape = 's32[1]{0}', space=sflag, size = 0x4, scoped, tag = 'scoped memory for tpu_custom_call.1']
    #allocation6 [shape = 'u8[8192]{0}', space=vmem, size = 0x2000, scoped, tag = 'input window, operand 1, single buffered']
    #allocation7 [shape = 's32[1]{0}', space=sflag, size = 0x4, scoped, tag = 'scoped memory for tpu_custom_call.1']
    #allocation8 [shape = 'u8[4096]{0}', space=vmem, size = 0x1000, scoped, tag = 'output window, operand 0, single buffered']
    %7 = vsyncpa [#allocation4], 0
    %8 = vsyncpa [#allocation7], 0
    %9 = vsyncpa [#allocation5], 0
    // Predicated region
    $region2: #{tpu_custom_call.1} parent=1 // pred_check
      _
    $region3: #{tpu_custom_call.1} parent=1 // pred_check_branch
      %11 = sbr.rel (0) target = $region5
    $region4: #{tpu_custom_call.1} parent=1 // pred_region
      %s13 = ssub.s32 128, 128
      %14 = vsyncadd [#allocation4], %s13
      %s15 = sshll.u32 [#allocation3], 4
      %s16 = int_to_ptr.vmem [resolvable:$true] %s15
      %21 = dma.hbm_to_vmem [thread:$0]  %s0, 128, %s16, [#allocation4], 64, 64, 4
    $region5: #{tpu_custom_call.1} parent=1 // pred_fallthru
      _
    // Predicated region
    $region6: #{tpu_custom_call.1} parent=1 // pred_check
      _
    $region7: #{tpu_custom_call.1} parent=1 // pred_check_branch
      %23 = sbr.rel (0) target = $region9
    $region8: #{tpu_custom_call.1} parent=1 // pred_region
      %s25 = ssub.s32 256, 256
      %26 = vsyncadd [#allocation7], %s25
      %s27 = sshll.u32 [#allocation6], 4
      %s28 = int_to_ptr.vmem [resolvable:$true] %s27
      %33 = dma.hbm_to_vmem [thread:$0]  %s1, 256, %s28, [#allocation7], 64, 64, 4
    $region9: #{tpu_custom_call.1} parent=1 // pred_fallthru
      _
    // Predicated region
    $region10: #{tpu_custom_call.1} parent=1 // pred_check
      _
    $region11: #{tpu_custom_call.1} parent=1 // pred_check_branch
      %35 = sbr.rel (0) target = $region13
    $region12: #{tpu_custom_call.1} parent=1 // pred_region
      %36 = dma.done [#allocation4], 128
    $region13: #{tpu_custom_call.1} parent=1 // pred_fallthru
      _
    // Predicated region
    $region14: #{tpu_custom_call.1} parent=1 // pred_check
      _
    $region15: #{tpu_custom_call.1} parent=1 // pred_check_branch
      %38 = sbr.rel (0) target = $region17
    $region16: #{tpu_custom_call.1} parent=1 // pred_region
      %39 = dma.done [#allocation7], 256
    $region17: #{tpu_custom_call.1} parent=1 // pred_fallthru
      _
    %p41 = scmp.eq.s32.totalorder 0, 0
    // Predicated region
    $region18: #{tpu_custom_call.1} parent=1 // pred_check
      %p42 = pneg %p41
    $region19: #{tpu_custom_call.1} parent=1 // pred_check_branch
      %44 = sbr.rel (%p42) target = $region21
    $region20: #{tpu_custom_call.1} parent=1 // pred_region
      %45 = vst [vmem:[#allocation2] sm:$0xff] 0.0
      %46 = vst [vmem:[#allocation2 + $0x8] sm:$0xff] 0.0
    $region21: #{tpu_custom_call.1} parent=1 // pred_fallthru
      _
    %v47 = vld [vmem:[#allocation2] sm:$0xff]
    %v48 = vld [vmem:[#allocation2 + $0x8] sm:$0xff]
    %v49 = vld [vmem:[#allocation3] sm:$0xf]
    %v50 = vld [vmem:[#allocation3 + $0x4] sm:$0xf]
    %v51 = vld [vmem:[#allocation6] sm:$0xf]
    %v52 = vld [vmem:[#allocation6 + $0x4] sm:$0xf]
    %v53 = vld [vmem:[#allocation6 + $0x8] sm:$0xf]
    %v54 = vld [vmem:[#allocation6 + $0xc] sm:$0xf]
    %v57 = vunpack.c.l.b16 %v49
    %v58 = vunpack.c.l.b16 %v50
    %v59 = vpack.c.b16 %v58, %v57
    %v64 = vunpack.c.l.b16 %v51
    %v65 = vunpack.c.l.b16 %v52
    %v66 = vunpack.c.l.b16 %v53
    %v67 = vunpack.c.l.b16 %v54
    %v68 = vpack.c.b16 %v65, %v64
    %v69 = vpack.c.b16 %v67, %v66
    %vm72 = vcmask 261120
    %v74 = vsel %vm72, %v59, 0
    %76 = vmatprep.subr.bf16.mxu0 0
    %77 = vmatpush1.bf16.msra.mxu0 %v68
    %78 = vmatprep.subr.bf16.mxu0 0
    %79 = vmatpush1.bf16.msra.mxu0 %v69
    %80 = vmatprep.subr.bf16.mxu0 0
    %81 = vmatpush1.bf16.msra.mxu0 0
    %82 = vmatprep.subr.bf16.mxu0 0
    %83 = vmatpush1.bf16.msra.mxu0 0
    %84 = vmatprep.subr.bf16.mxu0 0
    %85 = vmatpush1.bf16.msra.mxu0 0
    %86 = vmatprep.subr.bf16.mxu0 0
    %87 = vmatpush1.bf16.msra.mxu0 0
    %88 = vmatprep.subr.bf16.mxu0 0
    %89 = vmatpush1.bf16.msra.mxu0 0
    %90 = vmatprep.subr.bf16.mxu0 0
    %91 = vmatpush1.bf16.msra.mxu0 0
    %92 = vmatprep.subr.bf16.mxu0 0
    %93 = vmatpush1.bf16.msra.mxu0 0
    %94 = vmatprep.subr.bf16.mxu0 0
    %95 = vmatpush1.bf16.msra.mxu0 0
    %96 = vmatprep.subr.bf16.mxu0 0
    %97 = vmatpush1.bf16.msra.mxu0 0
    %98 = vmatprep.subr.bf16.mxu0 0
    %99 = vmatpush1.bf16.msra.mxu0 0
    %100 = vmatprep.subr.bf16.mxu0 0
    %101 = vmatpush1.bf16.msra.mxu0 0
    %102 = vmatprep.subr.bf16.mxu0 0
    %103 = vmatpush1.bf16.msra.mxu0 0
    %104 = vmatprep.subr.bf16.mxu0 0
    %105 = vmatpush1.bf16.msra.mxu0 0
    %106 = vmatprep.subr.bf16.mxu0 0
    %107 = vmatpush1.bf16.msra.mxu0 0
    %108 = vmatprep.mubr.bf16.mxu0 0
    %109 = vmatmul.mubr.bf16.gmra.mrb[0].mxu0 %v74
    %v110 = vpop.f32.mrb[0].mxu0
    %v111 = vadd.f32 0.0, %v110
    %v112 = vpop.f32.mrb[0].mxu0
    %v113 = vpop.f32.mrb[0].mxu0
    %v114 = vadd.f32 0.0, %v113
    %v115 = vpop.f32.mrb[0].mxu0
    %116 = vdwg.mxu0
    %v117 = vadd.f32 %v47, %v111
    %v118 = vadd.f32 %v48, %v114
    %119 = vst [vmem:[#allocation2] sm:$0xff] %v117
    %120 = vst [vmem:[#allocation2 + $0x8] sm:$0xff] %v118
    // Predicated region
    $region22: #{tpu_custom_call.1} parent=1 // pred_check
      %p121 = pneg %p41
    $region23: #{tpu_custom_call.1} parent=1 // pred_check_branch
      %123 = sbr.rel (%p121) target = $region25
    $region24: #{tpu_custom_call.1} parent=1 // pred_region
      %v124 = vld [vmem:[#allocation2] sm:$0xff]
      %v125 = vld [vmem:[#allocation2 + $0x8] sm:$0xff]
      %v126 = vpack.c.bf16 %v125, %v124
      %v128 = vunpack.c.l.b16 %v126
      %v129 = vunpack.c.h.b16 %v126
      %v130 = vpack.c.b16 %v128, %v128
      %v131 = vpack.c.b16 %v129, %v129
      %134 = vst [vmem:[#allocation8] sm:$0xf] %v130
      %135 = vst [vmem:[#allocation8 + $0x4] sm:$0xf] %v131
    $region25: #{tpu_custom_call.1} parent=1 // pred_fallthru
      _
    // Predicated region
    $region26: #{tpu_custom_call.1} parent=1 // pred_check
      _
    $region27: #{tpu_custom_call.1} parent=1 // pred_check_branch
      %137 = sbr.rel (0) target = $region29
    $region28: #{tpu_custom_call.1} parent=1 // pred_region
      %s139 = ssub.s32 128, 128
      %140 = vsyncadd [#allocation5], %s139
      %s141 = sshll.u32 [#allocation8], 4
      %s142 = int_to_ptr.vmem [resolvable:$true] %s141
      %147 = dma.vmem_to_hbm [thread:$0]  %s142, 128, %s2, [#allocation5], 64, 64, 4
    $region29: #{tpu_custom_call.1} parent=1 // pred_fallthru
      _
    // Predicated region
    $region30: #{tpu_custom_call.1} parent=1 // pred_check
      _
    $region31: #{tpu_custom_call.1} parent=1 // pred_check_branch
      %149 = sbr.rel (0) target = $region33
    $region32: #{tpu_custom_call.1} parent=1 // pred_region
      %150 = dma.done [#allocation5], 128
    $region33: #{tpu_custom_call.1} parent=1 // pred_fallthru
      _
    %151 = vsyncpa [#allocation4], 1
    %152 = vsyncpa [#allocation7], 1
    %153 = vsyncpa [#allocation5], 1

</llo_original>
